<compile_context>
chip_gen: v5e
topology: v5e:2x2
jax: 0.10.0
libtpu: 0.0.40
codegen_flags: <defaults>
</compile_context>

<pallas_src>
import jax
import jax.numpy as jnp
from jax import lax
from jax.experimental import pallas as pl
from jax.experimental.pallas import tpu as pltpu  # noqa: F401  (TPU backend)

# ----------------------------- constants ------------------------------------
INPUT_DIM = 32
HIDDEN_SIZE = 32
HIDDEN_LAYERS = 2
OUTPUT_DIM = 32
SEQ_LEN = 8
BETA = 5.0
P_MAX = 128            # fixed (lane-aligned) slot-memory capacity -> no recompiles
NEG_INF = -1e30


# --------------------------- in-kernel helpers --------------------------------
def _rnn_compute(inp_ref, h0_ref, wih_ref, whh_ref, b_ref):
    """Multi-layer tanh RNN over the whole sequence, fully unrolled.

    The input projection of each layer is hoisted out of the time loop as one
    (SEQ, 32)@(32, 32) matmul; the recurrence carries h in vregs (values only).

    Returns (g_seq (S,H), h_final (L,H)) as values.
    """
    x_seq = inp_ref[...]                                  # (S, D)
    h_finals = []
    for l in range(HIDDEN_LAYERS):                        # static layer unroll
        # Hoisted input projection + combined bias for all timesteps at once.
        pre = (jnp.dot(x_seq, wih_ref[l], preferred_element_type=jnp.float32)
               + b_ref[pl.ds(l, 1), :])                   # (S, H)
        whh = whh_ref[l]                                  # (H, H)
        h = h0_ref[pl.ds(l, 1), :]                        # (1, H), lives in vregs
        rows = []
        for t in range(SEQ_LEN):                          # static time unroll
            h = jnp.tanh(pre[t:t + 1, :] +
                         jnp.dot(h, whh, preferred_element_type=jnp.float32))
            rows.append(h)
        x_seq = jnp.concatenate(rows, axis=0)             # (S, H) next layer input
        h_finals.append(h)
    return x_seq, jnp.concatenate(h_finals, axis=0)       # (S,H), (L,H)


def _retrieve(q, keys, vals, mask_bias):
    """Masked slot-memory read: softmax(beta * q K^T + mask) @ V.

    q: (S, Dk)  keys: (P, Dk)  vals: (P, Dout)  mask_bias: (1, P) additive (0/-1e30).
    No transpose: dot_general contracts the last dims of q and keys directly.
    Normalization is applied to the (S, Dout) result with an approx reciprocal.
    """
    scores = lax.dot_general(q, keys, (((1,), (1,)), ((), ())),
                             preferred_element_type=jnp.float32) * BETA
    scores = scores + mask_bias                           # invalid slots -> -1e30
    m = jnp.max(scores, axis=-1, keepdims=True)
    e = jnp.exp(scores - m)                               # (S, P)
    denom = jnp.sum(e, axis=-1, keepdims=True)            # (S, 1)
    out = jnp.dot(e, vals, preferred_element_type=jnp.float32)   # (S, Dout)
    return out * pl.reciprocal(denom, approx=True)


# -------------------------------- kernels --------------------------------------
def rnn_kernel(inp_ref, h0_ref, wih_ref, whh_ref, b_ref, gout_ref, hout_ref):
    """RNN only (used on the first training step, when the memory is empty)."""
    g_seq, h_fin = _rnn_compute(inp_ref, h0_ref, wih_ref, whh_ref, b_ref)
    gout_ref[...] = g_seq
    hout_ref[...] = h_fin


def fused_kernel(inp_ref, h0_ref, wih_ref, whh_ref, b_ref, xobs_ref,
                 pg_ref, px_ref, mask_ref,
                 probg_ref, probx_ref, gout_ref, hout_ref):
    """Fused RNN recurrence + both slot-memory retrievals (one launch)."""
    g_seq, h_fin = _rnn_compute(inp_ref, h0_ref, wih_ref, whh_ref, b_ref)
    gout_ref[...] = g_seq
    hout_ref[...] = h_fin

    mask = mask_ref[...]                                  # (1, P)
    pg = pg_ref[...]                                      # (P, H)   g-part keys
    px = px_ref[...]                                      # (P, Dout) x-part keys == values
    probg_ref[...] = _retrieve(g_seq, pg, px, mask)       # == retrieve_x(g_cur)
    probx_ref[...] = _retrieve(xobs_ref[...], px, px, mask)


# ------------------------------ pallas wrappers ---------------------------------
def rnn_forward(inp, h0, wih_t, whh_t, bias):
    S, D = inp.shape
    L, H = h0.shape
    return pl.pallas_call(
        rnn_kernel,
        grid=(1,),
        out_shape=(jax.ShapeDtypeStruct((S, H), jnp.float32),
                   jax.ShapeDtypeStruct((L, H), jnp.float32)),
        in_specs=[pl.BlockSpec((S, D), lambda i: (0, 0)),
                  pl.BlockSpec((L, H), lambda i: (0, 0)),
                  pl.BlockSpec((L, D, H), lambda i: (0, 0, 0)),
                  pl.BlockSpec((L, H, H), lambda i: (0, 0, 0)),
                  pl.BlockSpec((L, H), lambda i: (0, 0))],
        out_specs=(pl.BlockSpec((S, H), lambda i: (0, 0)),
                   pl.BlockSpec((L, H), lambda i: (0, 0))),
    )(inp, h0, wih_t, whh_t, bias)


def rnn_retrieve(inp, h0, wih_t, whh_t, bias, x_obs, pg, px, mask_bias):
    S, D = inp.shape
    L, H = h0.shape
    P = pg.shape[0]
    Dout = px.shape[1]
    return pl.pallas_call(
        fused_kernel,
        grid=(1,),
        out_shape=(jax.ShapeDtypeStruct((S, Dout), jnp.float32),
                   jax.ShapeDtypeStruct((S, Dout), jnp.float32),
                   jax.ShapeDtypeStruct((S, H), jnp.float32),
                   jax.ShapeDtypeStruct((L, H), jnp.float32)),
        in_specs=[pl.BlockSpec((S, D), lambda i: (0, 0)),
                  pl.BlockSpec((L, H), lambda i: (0, 0)),
                  pl.BlockSpec((L, D, H), lambda i: (0, 0, 0)),
                  pl.BlockSpec((L, H, H), lambda i: (0, 0, 0)),
                  pl.BlockSpec((L, H), lambda i: (0, 0)),
                  pl.BlockSpec((S, Dout), lambda i: (0, 0)),
                  pl.BlockSpec((P, H), lambda i: (0, 0)),
                  pl.BlockSpec((P, Dout), lambda i: (0, 0)),
                  pl.BlockSpec((1, P), lambda i: (0, 0))],
        out_specs=(pl.BlockSpec((S, Dout), lambda i: (0, 0)),
                   pl.BlockSpec((S, Dout), lambda i: (0, 0)),
                   pl.BlockSpec((S, H), lambda i: (0, 0)),
                   pl.BlockSpec((L, H), lambda i: (0, 0))),
    )(inp, h0, wih_t, whh_t, bias, x_obs, pg, px, mask_bias)


# ------------------------------ slot memory --------------------------------------
class SlotMemory:
    """Fixed-capacity slot memory: patterns [x, g] stored in two preallocated
    buffers (px, pg) so retrieval-kernel shapes never change (no recompiles)."""

    def __init__(self, beta, p_max=P_MAX):
        self.beta = beta
        self.p_max = p_max
        self.count = 0
        self.px = jnp.zeros((p_max, OUTPUT_DIM), jnp.float32)    # x-part of patterns
        self.pg = jnp.zeros((p_max, HIDDEN_SIZE), jnp.float32)   # g-part of patterns

    def empty(self):
        return self.count == 0

    def store(self, x_part, g_part):
        n = x_part.shape[0]
        assert self.count + n <= self.p_max, "slot memory capacity exceeded"
        self.px = lax.dynamic_update_slice(self.px, x_part.astype(jnp.float32),
                                           (self.count, 0))
        self.pg = lax.dynamic_update_slice(self.pg, g_part.astype(jnp.float32),
                                           (self.count, 0))
        self.count += n

    def mask_bias(self):
        idx = jnp.arange(self.p_max)
        return jnp.where(idx < self.count, 0.0, NEG_INF).astype(jnp.float32)[None, :]


# ------------------------------- GridModule --------------------------------------
class GridModuleJAX:
    def __init__(self, key):
        L, H, D = HIDDEN_LAYERS, HIDDEN_SIZE, INPUT_DIM
        bound = 1.0 / jnp.sqrt(H)
        ks = jax.random.split(key, 4)
        # PyTorch weight_ih_l{k}: (H, D) -> stored pre-transposed as (D, H).
        self.wih_t = jax.random.uniform(ks[0], (L, D, H), jnp.float32, -bound, bound)
        self.whh_t = jax.random.uniform(ks[1], (L, H, H), jnp.float32, -bound, bound)
        b_ih = jax.random.uniform(ks[2], (L, H), jnp.float32, -bound, bound)
        b_hh = jax.random.uniform(ks[3], (L, H), jnp.float32, -bound, bound)
        self.bias = b_ih + b_hh                       # combined bias
        self.last_hidden = jnp.zeros((L, H), jnp.float32)
        self.memory = SlotMemory(beta=BETA)

    def g(self, inp):
        return rnn_forward(inp, self.last_hidden, self.wih_t, self.whh_t, self.bias)

    def forward(self, inp, x_obs=None, train=False, seq_len=SEQ_LEN):
        if train:
            if not self.memory.empty():
                # one fused kernel: RNN + retrieval(g_cur) + retrieval(x_obs)
                prob_g, prob_x, g_cur, h = rnn_retrieve(
                    inp, self.last_hidden, self.wih_t, self.whh_t, self.bias,
                    x_obs, self.memory.pg, self.memory.px, self.memory.mask_bias())
            else:
                g_cur, h = self.g(inp)
                # matches torch.full_like(g_cur, 1.0 / g_cur.size(0))
                prob_g = prob_x = jnp.full_like(g_cur, 1.0 / g_cur.shape[0])
            # store [x_obs, g_cur] AFTER retrieval (same ordering as the torch model)
            self.memory.store(x_obs, g_cur)
            return prob_g, prob_x, g_cur, h
        else:
            # eval: retrieve_x(g_cur) == prob_g branch of the fused kernel
            dummy_obs = jnp.zeros((inp.shape[0], OUTPUT_DIM), jnp.float32)
            x_p, _, _, _ = rnn_retrieve(
                inp, self.last_hidden, self.wih_t, self.whh_t, self.bias,
                dummy_obs, self.memory.pg, self.memory.px, self.memory.mask_bias())
            return x_p


# ---------------------------------- main ------------------------------------------
if __name__ == "__main__":
    key = jax.random.PRNGKey(0)
    k_model, k_inp, k_obs = jax.random.split(key, 3)

    model = GridModuleJAX(k_model)

    inp = jax.random.normal(k_inp, (SEQ_LEN, INPUT_DIM), jnp.float32)
    # one-hot-like observation distribution over OUTPUT_DIM
    x_obs = jax.nn.softmax(
        4.0 * jax.random.normal(k_obs, (SEQ_LEN, OUTPUT_DIM), jnp.float32), axis=-1)

    # first train step: memory empty -> RNN-only kernel, patterns stored
    prob_g0, prob_x0, g_cur0, h0 = model.forward(inp, x_obs, train=True)
    # second train step: memory non-empty -> fused RNN + dual-retrieval kernel
    prob_g1, prob_x1, g_cur1, h1 = model.forward(inp, x_obs, train=True)
    # eval path (same fused kernel, x-readout)
    x_p = model.forward(inp, train=False)

    jax.block_until_ready((prob_g0, prob_x0, prob_g1, prob_x1, g_cur1, h1, x_p))

    assert prob_g1.shape == (SEQ_LEN, OUTPUT_DIM)
    assert prob_x1.shape == (SEQ_LEN, OUTPUT_DIM)
    assert g_cur1.shape == (SEQ_LEN, HIDDEN_SIZE)
    assert h1.shape == (HIDDEN_LAYERS, HIDDEN_SIZE)
    assert x_p.shape == (SEQ_LEN, OUTPUT_DIM)
    assert bool(jnp.all(jnp.isfinite(prob_g1)))
    assert bool(jnp.all(jnp.isfinite(x_p)))
    print("KERNEL_OK")
</pallas_src>

<mosaic_0001>
module attributes {stable_mosaic.version = 11 : i64} {
  func.func @rnn_kernel(%arg0: i32, %arg1: memref<8x32xf32, #tpu.memory_space<vmem>>, %arg2: memref<2x32xf32, #tpu.memory_space<vmem>>, %arg3: memref<2x32x32xf32, #tpu.memory_space<vmem>>, %arg4: memref<2x32x32xf32, #tpu.memory_space<vmem>>, %arg5: memref<2x32xf32, #tpu.memory_space<vmem>>, %arg6: memref<8x32xf32, #tpu.memory_space<vmem>>, %arg7: memref<2x32xf32, #tpu.memory_space<vmem>>) attributes {dimension_semantics = [#tpu.dimension_semantics<arbitrary>], iteration_bounds = array<i64: 1>, scalar_prefetch = 0 : i64, scratch_operands = 0 : i64, tpu.core_type = #tpu.core_type<tc>, window_params = [{pipeline_mode = #tpu.pipeline_mode<synchronous>, transform_indices = @transform_0, window_bounds = array<i64: 8, 32>}, {pipeline_mode = #tpu.pipeline_mode<synchronous>, transform_indices = @transform_1, window_bounds = array<i64: 2, 32>}, {pipeline_mode = #tpu.pipeline_mode<synchronous>, transform_indices = @transform_2, window_bounds = array<i64: 2, 32, 32>}, {pipeline_mode = #tpu.pipeline_mode<synchronous>, transform_indices = @transform_3, window_bounds = array<i64: 2, 32, 32>}, {pipeline_mode = #tpu.pipeline_mode<synchronous>, transform_indices = @transform_4, window_bounds = array<i64: 2, 32>}, {pipeline_mode = #tpu.pipeline_mode<synchronous>, transform_indices = @transform_5, window_bounds = array<i64: 8, 32>}, {pipeline_mode = #tpu.pipeline_mode<synchronous>, transform_indices = @transform_6, window_bounds = array<i64: 2, 32>}]} {
    %c0 = arith.constant 0 : index
    %c0_0 = arith.constant 0 : index
    %0 = vector.load %arg1[%c0, %c0_0] : memref<8x32xf32, #tpu.memory_space<vmem>>, vector<8x32xf32>
    %c0_1 = arith.constant 0 : index
    %c0_2 = arith.constant 0 : index
    %c0_3 = arith.constant 0 : index
    %1 = vector.load %arg3[%c0_1, %c0_2, %c0_3] : memref<2x32x32xf32, #tpu.memory_space<vmem>>, vector<1x32x32xf32>
    %2 = vector.shape_cast %1 : vector<1x32x32xf32> to vector<32x32xf32>
    %cst = arith.constant dense<0.000000e+00> : vector<8x32xf32>
    %3 = tpu.matmul %0, %2, %cst {dimension_numbers = #tpu.dot_dimension_numbers<[1], [0], [0], [1], [0, 0, 1, 1], [], []>} : vector<8x32xf32>, vector<32x32xf32>, vector<8x32xf32> -> vector<8x32xf32>
    %c0_4 = arith.constant 0 : index
    %c0_5 = arith.constant 0 : index
    %4 = vector.load %arg5[%c0_4, %c0_5] : memref<2x32xf32, #tpu.memory_space<vmem>>, vector<1x32xf32>
    %5 = vector.broadcast %4 : vector<1x32xf32> to vector<8x32xf32>
    %6 = arith.addf %3, %5 : vector<8x32xf32>
    %c0_6 = arith.constant 0 : index
    %c0_7 = arith.constant 0 : index
    %c0_8 = arith.constant 0 : index
    %7 = vector.load %arg4[%c0_6, %c0_7, %c0_8] : memref<2x32x32xf32, #tpu.memory_space<vmem>>, vector<1x32x32xf32>
    %8 = vector.shape_cast %7 : vector<1x32x32xf32> to vector<32x32xf32>
    %c0_9 = arith.constant 0 : index
    %c0_10 = arith.constant 0 : index
    %9 = vector.load %arg2[%c0_9, %c0_10] : memref<2x32xf32, #tpu.memory_space<vmem>>, vector<1x32xf32>
    %10 = vector.extract_strided_slice %6 {offsets = [0, 0], sizes = [1, 32], strides = [1, 1]} : vector<8x32xf32> to vector<1x32xf32>
    %cst_11 = arith.constant dense<0.000000e+00> : vector<1x32xf32>
    %11 = tpu.matmul %9, %8, %cst_11 {dimension_numbers = #tpu.dot_dimension_numbers<[1], [0], [0], [1], [0, 0, 1, 1], [], []>} : vector<1x32xf32>, vector<32x32xf32>, vector<1x32xf32> -> vector<1x32xf32>
    %12 = arith.addf %10, %11 : vector<1x32xf32>
    %13 = math.tanh %12 : vector<1x32xf32>
    %14 = vector.extract_strided_slice %6 {offsets = [1, 0], sizes = [1, 32], strides = [1, 1]} : vector<8x32xf32> to vector<1x32xf32>
    %cst_12 = arith.constant dense<0.000000e+00> : vector<1x32xf32>
    %15 = tpu.matmul %13, %8, %cst_12 {dimension_numbers = #tpu.dot_dimension_numbers<[1], [0], [0], [1], [0, 0, 1, 1], [], []>} : vector<1x32xf32>, vector<32x32xf32>, vector<1x32xf32> -> vector<1x32xf32>
    %16 = arith.addf %14, %15 : vector<1x32xf32>
    %17 = math.tanh %16 : vector<1x32xf32>
    %18 = vector.extract_strided_slice %6 {offsets = [2, 0], sizes = [1, 32], strides = [1, 1]} : vector<8x32xf32> to vector<1x32xf32>
    %cst_13 = arith.constant dense<0.000000e+00> : vector<1x32xf32>
    %19 = tpu.matmul %17, %8, %cst_13 {dimension_numbers = #tpu.dot_dimension_numbers<[1], [0], [0], [1], [0, 0, 1, 1], [], []>} : vector<1x32xf32>, vector<32x32xf32>, vector<1x32xf32> -> vector<1x32xf32>
    %20 = arith.addf %18, %19 : vector<1x32xf32>
    %21 = math.tanh %20 : vector<1x32xf32>
    %22 = vector.extract_strided_slice %6 {offsets = [3, 0], sizes = [1, 32], strides = [1, 1]} : vector<8x32xf32> to vector<1x32xf32>
    %cst_14 = arith.constant dense<0.000000e+00> : vector<1x32xf32>
    %23 = tpu.matmul %21, %8, %cst_14 {dimension_numbers = #tpu.dot_dimension_numbers<[1], [0], [0], [1], [0, 0, 1, 1], [], []>} : vector<1x32xf32>, vector<32x32xf32>, vector<1x32xf32> -> vector<1x32xf32>
    %24 = arith.addf %22, %23 : vector<1x32xf32>
    %25 = math.tanh %24 : vector<1x32xf32>
    %26 = vector.extract_strided_slice %6 {offsets = [4, 0], sizes = [1, 32], strides = [1, 1]} : vector<8x32xf32> to vector<1x32xf32>
    %cst_15 = arith.constant dense<0.000000e+00> : vector<1x32xf32>
    %27 = tpu.matmul %25, %8, %cst_15 {dimension_numbers = #tpu.dot_dimension_numbers<[1], [0], [0], [1], [0, 0, 1, 1], [], []>} : vector<1x32xf32>, vector<32x32xf32>, vector<1x32xf32> -> vector<1x32xf32>
    %28 = arith.addf %26, %27 : vector<1x32xf32>
    %29 = math.tanh %28 : vector<1x32xf32>
    %30 = vector.extract_strided_slice %6 {offsets = [5, 0], sizes = [1, 32], strides = [1, 1]} : vector<8x32xf32> to vector<1x32xf32>
    %cst_16 = arith.constant dense<0.000000e+00> : vector<1x32xf32>
    %31 = tpu.matmul %29, %8, %cst_16 {dimension_numbers = #tpu.dot_dimension_numbers<[1], [0], [0], [1], [0, 0, 1, 1], [], []>} : vector<1x32xf32>, vector<32x32xf32>, vector<1x32xf32> -> vector<1x32xf32>
    %32 = arith.addf %30, %31 : vector<1x32xf32>
    %33 = math.tanh %32 : vector<1x32xf32>
    %34 = vector.extract_strided_slice %6 {offsets = [6, 0], sizes = [1, 32], strides = [1, 1]} : vector<8x32xf32> to vector<1x32xf32>
    %cst_17 = arith.constant dense<0.000000e+00> : vector<1x32xf32>
    %35 = tpu.matmul %33, %8, %cst_17 {dimension_numbers = #tpu.dot_dimension_numbers<[1], [0], [0], [1], [0, 0, 1, 1], [], []>} : vector<1x32xf32>, vector<32x32xf32>, vector<1x32xf32> -> vector<1x32xf32>
    %36 = arith.addf %34, %35 : vector<1x32xf32>
    %37 = math.tanh %36 : vector<1x32xf32>
    %38 = vector.extract_strided_slice %6 {offsets = [7, 0], sizes = [1, 32], strides = [1, 1]} : vector<8x32xf32> to vector<1x32xf32>
    %cst_18 = arith.constant dense<0.000000e+00> : vector<1x32xf32>
    %39 = tpu.matmul %37, %8, %cst_18 {dimension_numbers = #tpu.dot_dimension_numbers<[1], [0], [0], [1], [0, 0, 1, 1], [], []>} : vector<1x32xf32>, vector<32x32xf32>, vector<1x32xf32> -> vector<1x32xf32>
    %40 = arith.addf %38, %39 : vector<1x32xf32>
    %41 = math.tanh %40 : vector<1x32xf32>
    %42 = tpu.concatenate %13, %17, %21, %25, %29, %33, %37, %41 in 0 : vector<1x32xf32>, vector<1x32xf32>, vector<1x32xf32>, vector<1x32xf32>, vector<1x32xf32>, vector<1x32xf32>, vector<1x32xf32>, vector<1x32xf32> -> vector<8x32xf32>
    %c1 = arith.constant 1 : index
    %c0_19 = arith.constant 0 : index
    %c0_20 = arith.constant 0 : index
    %43 = vector.load %arg3[%c1, %c0_19, %c0_20] : memref<2x32x32xf32, #tpu.memory_space<vmem>>, vector<1x32x32xf32>
    %44 = vector.shape_cast %43 : vector<1x32x32xf32> to vector<32x32xf32>
    %cst_21 = arith.constant dense<0.000000e+00> : vector<8x32xf32>
    %45 = tpu.matmul %42, %44, %cst_21 {dimension_numbers = #tpu.dot_dimension_numbers<[1], [0], [0], [1], [0, 0, 1, 1], [], []>} : vector<8x32xf32>, vector<32x32xf32>, vector<8x32xf32> -> vector<8x32xf32>
    %c1_22 = arith.constant 1 : index
    %c0_23 = arith.constant 0 : index
    %46 = vector.load %arg5[%c1_22, %c0_23] : memref<2x32xf32, #tpu.memory_space<vmem>>, vector<1x32xf32>
    %47 = vector.broadcast %46 : vector<1x32xf32> to vector<8x32xf32>
    %48 = arith.addf %45, %47 : vector<8x32xf32>
    %c1_24 = arith.constant 1 : index
    %c0_25 = arith.constant 0 : index
    %c0_26 = arith.constant 0 : index
    %49 = vector.load %arg4[%c1_24, %c0_25, %c0_26] : memref<2x32x32xf32, #tpu.memory_space<vmem>>, vector<1x32x32xf32>
    %50 = vector.shape_cast %49 : vector<1x32x32xf32> to vector<32x32xf32>
    %c1_27 = arith.constant 1 : index
    %c0_28 = arith.constant 0 : index
    %51 = vector.load %arg2[%c1_27, %c0_28] : memref<2x32xf32, #tpu.memory_space<vmem>>, vector<1x32xf32>
    %52 = vector.extract_strided_slice %48 {offsets = [0, 0], sizes = [1, 32], strides = [1, 1]} : vector<8x32xf32> to vector<1x32xf32>
    %cst_29 = arith.constant dense<0.000000e+00> : vector<1x32xf32>
    %53 = tpu.matmul %51, %50, %cst_29 {dimension_numbers = #tpu.dot_dimension_numbers<[1], [0], [0], [1], [0, 0, 1, 1], [], []>} : vector<1x32xf32>, vector<32x32xf32>, vector<1x32xf32> -> vector<1x32xf32>
    %54 = arith.addf %52, %53 : vector<1x32xf32>
    %55 = math.tanh %54 : vector<1x32xf32>
    %56 = vector.extract_strided_slice %48 {offsets = [1, 0], sizes = [1, 32], strides = [1, 1]} : vector<8x32xf32> to vector<1x32xf32>
    %cst_30 = arith.constant dense<0.000000e+00> : vector<1x32xf32>
    %57 = tpu.matmul %55, %50, %cst_30 {dimension_numbers = #tpu.dot_dimension_numbers<[1], [0], [0], [1], [0, 0, 1, 1], [], []>} : vector<1x32xf32>, vector<32x32xf32>, vector<1x32xf32> -> vector<1x32xf32>
    %58 = arith.addf %56, %57 : vector<1x32xf32>
    %59 = math.tanh %58 : vector<1x32xf32>
    %60 = vector.extract_strided_slice %48 {offsets = [2, 0], sizes = [1, 32], strides = [1, 1]} : vector<8x32xf32> to vector<1x32xf32>
    %cst_31 = arith.constant dense<0.000000e+00> : vector<1x32xf32>
    %61 = tpu.matmul %59, %50, %cst_31 {dimension_numbers = #tpu.dot_dimension_numbers<[1], [0], [0], [1], [0, 0, 1, 1], [], []>} : vector<1x32xf32>, vector<32x32xf32>, vector<1x32xf32> -> vector<1x32xf32>
    %62 = arith.addf %60, %61 : vector<1x32xf32>
    %63 = math.tanh %62 : vector<1x32xf32>
    %64 = vector.extract_strided_slice %48 {offsets = [3, 0], sizes = [1, 32], strides = [1, 1]} : vector<8x32xf32> to vector<1x32xf32>
    %cst_32 = arith.constant dense<0.000000e+00> : vector<1x32xf32>
    %65 = tpu.matmul %63, %50, %cst_32 {dimension_numbers = #tpu.dot_dimension_numbers<[1], [0], [0], [1], [0, 0, 1, 1], [], []>} : vector<1x32xf32>, vector<32x32xf32>, vector<1x32xf32> -> vector<1x32xf32>
    %66 = arith.addf %64, %65 : vector<1x32xf32>
    %67 = math.tanh %66 : vector<1x32xf32>
    %68 = vector.extract_strided_slice %48 {offsets = [4, 0], sizes = [1, 32], strides = [1, 1]} : vector<8x32xf32> to vector<1x32xf32>
    %cst_33 = arith.constant dense<0.000000e+00> : vector<1x32xf32>
    %69 = tpu.matmul %67, %50, %cst_33 {dimension_numbers = #tpu.dot_dimension_numbers<[1], [0], [0], [1], [0, 0, 1, 1], [], []>} : vector<1x32xf32>, vector<32x32xf32>, vector<1x32xf32> -> vector<1x32xf32>
    %70 = arith.addf %68, %69 : vector<1x32xf32>
    %71 = math.tanh %70 : vector<1x32xf32>
    %72 = vector.extract_strided_slice %48 {offsets = [5, 0], sizes = [1, 32], strides = [1, 1]} : vector<8x32xf32> to vector<1x32xf32>
    %cst_34 = arith.constant dense<0.000000e+00> : vector<1x32xf32>
    %73 = tpu.matmul %71, %50, %cst_34 {dimension_numbers = #tpu.dot_dimension_numbers<[1], [0], [0], [1], [0, 0, 1, 1], [], []>} : vector<1x32xf32>, vector<32x32xf32>, vector<1x32xf32> -> vector<1x32xf32>
    %74 = arith.addf %72, %73 : vector<1x32xf32>
    %75 = math.tanh %74 : vector<1x32xf32>
    %76 = vector.extract_strided_slice %48 {offsets = [6, 0], sizes = [1, 32], strides = [1, 1]} : vector<8x32xf32> to vector<1x32xf32>
    %cst_35 = arith.constant dense<0.000000e+00> : vector<1x32xf32>
    %77 = tpu.matmul %75, %50, %cst_35 {dimension_numbers = #tpu.dot_dimension_numbers<[1], [0], [0], [1], [0, 0, 1, 1], [], []>} : vector<1x32xf32>, vector<32x32xf32>, vector<1x32xf32> -> vector<1x32xf32>
    %78 = arith.addf %76, %77 : vector<1x32xf32>
    %79 = math.tanh %78 : vector<1x32xf32>
    %80 = vector.extract_strided_slice %48 {offsets = [7, 0], sizes = [1, 32], strides = [1, 1]} : vector<8x32xf32> to vector<1x32xf32>
    %cst_36 = arith.constant dense<0.000000e+00> : vector<1x32xf32>
    %81 = tpu.matmul %79, %50, %cst_36 {dimension_numbers = #tpu.dot_dimension_numbers<[1], [0], [0], [1], [0, 0, 1, 1], [], []>} : vector<1x32xf32>, vector<32x32xf32>, vector<1x32xf32> -> vector<1x32xf32>
    %82 = arith.addf %80, %81 : vector<1x32xf32>
    %83 = math.tanh %82 : vector<1x32xf32>
    %84 = tpu.concatenate %55, %59, %63, %67, %71, %75, %79, %83 in 0 : vector<1x32xf32>, vector<1x32xf32>, vector<1x32xf32>, vector<1x32xf32>, vector<1x32xf32>, vector<1x32xf32>, vector<1x32xf32>, vector<1x32xf32> -> vector<8x32xf32>
    %85 = tpu.concatenate %41, %83 in 0 : vector<1x32xf32>, vector<1x32xf32> -> vector<2x32xf32>
    %c0_37 = arith.constant 0 : index
    %c0_38 = arith.constant 0 : index
    %86 = vector.load %arg6[%c0_37, %c0_38] : memref<8x32xf32, #tpu.memory_space<vmem>>, vector<8x32xf32>
    tpu.vector_store %arg6[%c0_37, %c0_38], %84 {strides = array<i32>} : memref<8x32xf32, #tpu.memory_space<vmem>>, vector<8x32xf32>,
    %c0_39 = arith.constant 0 : index
    %c0_40 = arith.constant 0 : index
    %87 = vector.load %arg7[%c0_39, %c0_40] : memref<2x32xf32, #tpu.memory_space<vmem>>, vector<2x32xf32>
    tpu.vector_store %arg7[%c0_39, %c0_40], %85 {strides = array<i32>} : memref<2x32xf32, #tpu.memory_space<vmem>>, vector<2x32xf32>,
    return
  }
  func.func @transform_0(%arg0: i32) -> (i32, i32) {
    %c0_i32 = arith.constant 0 : i32
    %c0_i32_0 = arith.constant 0 : i32
    %c0_i32_1 = arith.constant 0 : i32
    return %c0_i32, %c0_i32_0 : i32, i32
  }
  func.func @transform_1(%arg0: i32) -> (i32, i32) {
    %c0_i32 = arith.constant 0 : i32
    %c0_i32_0 = arith.constant 0 : i32
    %c0_i32_1 = arith.constant 0 : i32
    return %c0_i32, %c0_i32_0 : i32, i32
  }
  func.func @transform_2(%arg0: i32) -> (i32, i32, i32) {
    %c0_i32 = arith.constant 0 : i32
    %c0_i32_0 = arith.constant 0 : i32
    %c0_i32_1 = arith.constant 0 : i32
    %c0_i32_2 = arith.constant 0 : i32
    return %c0_i32, %c0_i32_0, %c0_i32_1 : i32, i32, i32
  }
  func.func @transform_3(%arg0: i32) -> (i32, i32, i32) {
    %c0_i32 = arith.constant 0 : i32
    %c0_i32_0 = arith.constant 0 : i32
    %c0_i32_1 = arith.constant 0 : i32
    %c0_i32_2 = arith.constant 0 : i32
    return %c0_i32, %c0_i32_0, %c0_i32_1 : i32, i32, i32
  }
  func.func @transform_4(%arg0: i32) -> (i32, i32) {
    %c0_i32 = arith.constant 0 : i32
    %c0_i32_0 = arith.constant 0 : i32
    %c0_i32_1 = arith.constant 0 : i32
    return %c0_i32, %c0_i32_0 : i32, i32
  }
  func.func @transform_5(%arg0: i32) -> (i32, i32) {
    %c0_i32 = arith.constant 0 : i32
    %c0_i32_0 = arith.constant 0 : i32
    %c0_i32_1 = arith.constant 0 : i32
    return %c0_i32, %c0_i32_0 : i32, i32
  }
  func.func @transform_6(%arg0: i32) -> (i32, i32) {
    %c0_i32 = arith.constant 0 : i32
    %c0_i32_0 = arith.constant 0 : i32
    %c0_i32_1 = arith.constant 0 : i32
    return %c0_i32, %c0_i32_0 : i32, i32
  }
}

</mosaic_0001>

<llo_original>
// kernel: tpu_custom_call.1
$region0: #{tpu_custom_call.1}
  #allocation0 [shape = 'u32[]', space=smem, size = 0x4, offset = 0x4, fixed_abs, tag = 'smem constant byte address 0x4 - core index']
  #allocation1 [shape = 'u32[72,128]{1,0:T(1,128)}', space=vmem, size = 0x9000, scoped, tag = 'internal scratch']
  %s0 = inlined_call_operand.hbm [shape: f32[8,32], index: 0, kind: input, shape index: {}]
  %s1 = inlined_call_operand.hbm [shape: f32[2,32], index: 1, kind: input, shape index: {}]
  %s2 = inlined_call_operand.hbm [shape: f32[2,32,32], index: 2, kind: input, shape index: {}]
  %s3 = inlined_call_operand.hbm [shape: f32[2,32,32], index: 3, kind: input, shape index: {}]
  %s4 = inlined_call_operand.vmem [shape: f32[2,32], index: 4, kind: input, shape index: {}]
  %s5 = inlined_call_operand.hbm [shape: f32[8,32], index: 5, kind: output, shape index: {0}]
  %s6 = inlined_call_operand.hbm [shape: f32[2,32], index: 6, kind: output, shape index: {1}]
  %7 = xla_tuple %s5, %s6
  %s8 = sld [smem:[#allocation0]]
  $region54: #{tpu_custom_call.1} parent=0
    _
  %s10 = ssub.s32 1, %s8
  %s11 = scalar_select 0, %s10, %s8
  $region1: #{tpu_custom_call.1} parent=0
    #allocation2 [shape = 'u8[4096]{0}', space=vmem, size = 0x1000, scoped, tag = 'input window, operand 0, single buffered']
    #allocation3 [shape = 's32[1]{0}', space=sflag, size = 0x4, scoped, tag = 'scoped memory for tpu_custom_call.1']
    #allocation4 [shape = 's32[1]{0}', space=sflag, size = 0x4, scoped, tag = 'scoped memory for tpu_custom_call.1']
    #allocation5 [shape = 'u8[1024]{0}', space=vmem, size = 0x400, scoped, tag = 'input window, operand 1, single buffered']
    #allocation6 [shape = 's32[1]{0}', space=sflag, size = 0x4, scoped, tag = 'scoped memory for tpu_custom_call.1']
    #allocation7 [shape = 'u8[32768]{0}', space=vmem, size = 0x8000, scoped, tag = 'input window, operand 2, single buffered']
    #allocation8 [shape = 'u8[32768]{0}', space=vmem, size = 0x8000, scoped, tag = 'input window, operand 3, single buffered']
    #allocation9 [shape = 's32[1]{0}', space=sflag, size = 0x4, scoped, tag = 'scoped memory for tpu_custom_call.1']
    #allocation10 [shape = 'u8[4096]{0}', space=vmem, size = 0x1000, scoped, tag = 'output window, operand 0, single buffered']
    #allocation11 [shape = 'u8[1024]{0}', space=vmem, size = 0x400, scoped, tag = 'output window, operand 1, single buffered']
    #allocation12 [shape = 's32[1]{0}', space=sflag, size = 0x4, scoped, tag = 'scoped memory for tpu_custom_call.1']
    %12 = vsyncpa [#allocation3], 0
    %13 = vsyncpa [#allocation6], 0
    %14 = vsyncpa [#allocation9], 0
    %15 = vsyncpa [#allocation4], 0
    %16 = vsyncpa [#allocation12], 0
    // Predicated region
    $region2: #{tpu_custom_call.1} parent=1 // pred_check
      _
    $region3: #{tpu_custom_call.1} parent=1 // pred_check_branch
      %18 = sbr.rel (0) target = $region5
    $region4: #{tpu_custom_call.1} parent=1 // pred_region
      %20 = vsyncadd [#allocation3], 0
      %s22 = sshll.u32 %s0, 4
      %s23 = int_to_ptr.hbm [resolvable:$true] %s22
      %s24 = sshll.u32 [#allocation2], 4
      %s25 = int_to_ptr.vmem [resolvable:$true] %s24
      %27 = dma.hbm_to_vmem [thread:$0]  %s23, 128, %s25, [#allocation3]
    $region5: #{tpu_custom_call.1} parent=1 // pred_fallthru
      _
    // Predicated region
    $region6: #{tpu_custom_call.1} parent=1 // pred_check
      _
    $region7: #{tpu_custom_call.1} parent=1 // pred_check_branch
      %29 = sbr.rel (0) target = $region9
    $region8: #{tpu_custom_call.1} parent=1 // pred_region
      %31 = vsyncadd [#allocation6], 0
      %s33 = sshll.u32 %s1, 4
      %s34 = int_to_ptr.hbm [resolvable:$true] %s33
      %s35 = sshll.u32 [#allocation5], 4
      %s36 = int_to_ptr.vmem [resolvable:$true] %s35
      %38 = dma.hbm_to_vmem [thread:$0]  %s34, 32, %s36, [#allocation6]
    $region9: #{tpu_custom_call.1} parent=1 // pred_fallthru
      _
    // Predicated region
    $region10: #{tpu_custom_call.1} parent=1 // pred_check
      _
    $region11: #{tpu_custom_call.1} parent=1 // pred_check_branch
      %40 = sbr.rel (0) target = $region13
    $region12: #{tpu_custom_call.1} parent=1 // pred_region
      %42 = vsyncadd [#allocation6], 0
      %s43 = sshll.u32 %s2, 4
      %s44 = int_to_ptr.hbm [resolvable:$true] %s43
      %s45 = sshll.u32 [#allocation7], 4
      %s46 = int_to_ptr.vmem [resolvable:$true] %s45
      %51 = dma.hbm_to_vmem [thread:$0]  %s44, 1024, %s46, [#allocation6], 128, 128, 8
    $region13: #{tpu_custom_call.1} parent=1 // pred_fallthru
      _
    // Predicated region
    $region14: #{tpu_custom_call.1} parent=1 // pred_check
      _
    $region15: #{tpu_custom_call.1} parent=1 // pred_check_branch
      %53 = sbr.rel (0) target = $region17
    $region16: #{tpu_custom_call.1} parent=1 // pred_region
      %55 = vsyncadd [#allocation9], 0
      %s56 = sshll.u32 %s3, 4
      %s57 = int_to_ptr.hbm [resolvable:$true] %s56
      %s58 = sshll.u32 [#allocation8], 4
      %s59 = int_to_ptr.vmem [resolvable:$true] %s58
      %64 = dma.hbm_to_vmem [thread:$0]  %s57, 1024, %s59, [#allocation9], 128, 128, 8
    $region17: #{tpu_custom_call.1} parent=1 // pred_fallthru
      _
    // Predicated region
    $region18: #{tpu_custom_call.1} parent=1 // pred_check
      _
    $region19: #{tpu_custom_call.1} parent=1 // pred_check_branch
      %66 = sbr.rel (0) target = $region21
    $region20: #{tpu_custom_call.1} parent=1 // pred_region
      _
    $region21: #{tpu_custom_call.1} parent=1 // pred_fallthru
      _
    // Predicated region
    $region22: #{tpu_custom_call.1} parent=1 // pred_check
      _
    $region23: #{tpu_custom_call.1} parent=1 // pred_check_branch
      %68 = sbr.rel (0) target = $region25
    $region24: #{tpu_custom_call.1} parent=1 // pred_region
      %70 = dma.done [#allocation3], 128
    $region25: #{tpu_custom_call.1} parent=1 // pred_fallthru
      _
    // Predicated region
    $region26: #{tpu_custom_call.1} parent=1 // pred_check
      _
    $region27: #{tpu_custom_call.1} parent=1 // pred_check_branch
      %72 = sbr.rel (0) target = $region29
    $region28: #{tpu_custom_call.1} parent=1 // pred_region
      %74 = dma.done [#allocation6], 32
    $region29: #{tpu_custom_call.1} parent=1 // pred_fallthru
      _
    // Predicated region
    $region30: #{tpu_custom_call.1} parent=1 // pred_check
      _
    $region31: #{tpu_custom_call.1} parent=1 // pred_check_branch
      %76 = sbr.rel (0) target = $region33
    $region32: #{tpu_custom_call.1} parent=1 // pred_region
      %78 = dma.done [#allocation6], 1024
    $region33: #{tpu_custom_call.1} parent=1 // pred_fallthru
      _
    // Predicated region
    $region34: #{tpu_custom_call.1} parent=1 // pred_check
      _
    $region35: #{tpu_custom_call.1} parent=1 // pred_check_branch
      %80 = sbr.rel (0) target = $region37
    $region36: #{tpu_custom_call.1} parent=1 // pred_region
      %82 = dma.done [#allocation9], 1024
    $region37: #{tpu_custom_call.1} parent=1 // pred_fallthru
      _
    %v83 = vld [vmem:[#allocation2] sm:$0xff]
    %v84 = vld [vmem:[#allocation7] sm:$0xff]
    %v85 = vld [vmem:[#allocation7 + $0x8] sm:$0xff]
    %v86 = vld [vmem:[#allocation7 + $0x10] sm:$0xff]
    %v87 = vld [vmem:[#allocation7 + $0x18] sm:$0xff]
    %v88 = vld [vmem:[%s4] sm:$0x1]
    %v89 = vperm.slane %v88, 0
    %vm90 = vcmask 261120
    %v92 = vsel %vm90, %v83, 0
    %94 = vmatpush.msra.mxu0 0.0
    %95 = vmatpush.msra.mxu0 0.0
    %96 = vmatpush.msra.mxu0 0.0
    %97 = vmatpush.msra.mxu0 0.0
    %98 = vmatpush.msra.mxu0 0.0
    %99 = vmatpush.msra.mxu0 0.0
    %100 = vmatpush.msra.mxu0 0.0
    %101 = vmatpush.msra.mxu0 0.0
    %102 = vmatpush.msra.mxu0 0.0
    %103 = vmatpush.msra.mxu0 0.0
    %104 = vmatpush.msra.mxu0 0.0
    %105 = vmatpush.msra.mxu0 0.0
    %106 = vmatpush.msra.mxu0 %v87
    %107 = vmatpush.msra.mxu0 %v86
    %108 = vmatpush.msra.mxu0 %v85
    %109 = vmatpush.msra.mxu0 %v84
    %110 = vmatmul.f32.gmra.mxu0 %v92
    %v111 = vpop.f32.mrf.mxu0
    %v112 = vadd.f32 %v89, %v111
    %113 = vdwg.mxu0
    %v114 = vld [vmem:[#allocation8] sm:$0xff]
    %v115 = vld [vmem:[#allocation8 + $0x8] sm:$0xff]
    %v116 = vld [vmem:[#allocation8 + $0x10] sm:$0xff]
    %v117 = vld [vmem:[#allocation8 + $0x18] sm:$0xff]
    %v118 = vld [vmem:[#allocation5] sm:$0x1]
    %v120 = vsel %vm90, %v118, 0
    %122 = vmatpush.msra.mxu0 0.0
    %123 = vmatpush.msra.mxu0 0.0
    %124 = vmatpush.msra.mxu0 0.0
    %125 = vmatpush.msra.mxu0 0.0
    %126 = vmatpush.msra.mxu0 0.0
    %127 = vmatpush.msra.mxu0 0.0
    %128 = vmatpush.msra.mxu0 0.0
    %129 = vmatpush.msra.mxu0 0.0
    %130 = vmatpush.msra.mxu0 0.0
    %131 = vmatpush.msra.mxu0 0.0
    %132 = vmatpush.msra.mxu0 0.0
    %133 = vmatpush.msra.mxu0 0.0
    %134 = vmatpush.msra.mxu0 %v117
    %135 = vmatpush.msra.mxu0 %v116
    %136 = vmatpush.msra.mxu0 %v115
    %137 = vmatpush.msra.mxu0 %v114
    %138 = vmatmul.f32.gmra.mxu0 %v120
    %v139 = vpop.f32.mrf.mxu0
    %v140 = vadd.f32 0.0, %v139
    %141 = vdwg.mxu0
    %v142 = vadd.f32 %v112, %v140
    %v143 = vtanh.pop %v142
    %v145 = vsel %vm90, %v143, 0
    %147 = vmatpush.msra.mxu0 0.0
    %148 = vmatpush.msra.mxu0 0.0
    %149 = vmatpush.msra.mxu0 0.0
    %150 = vmatpush.msra.mxu0 0.0
    %151 = vmatpush.msra.mxu0 0.0
    %152 = vmatpush.msra.mxu0 0.0
    %153 = vmatpush.msra.mxu0 0.0
    %154 = vmatpush.msra.mxu0 0.0
    %155 = vmatpush.msra.mxu0 0.0
    %156 = vmatpush.msra.mxu0 0.0
    %157 = vmatpush.msra.mxu0 0.0
    %158 = vmatpush.msra.mxu0 0.0
    %159 = vmatpush.msra.mxu0 %v117
    %160 = vmatpush.msra.mxu0 %v116
    %161 = vmatpush.msra.mxu0 %v115
    %162 = vmatpush.msra.mxu0 %v114
    %163 = vmatmul.f32.gmra.mxu0 %v145
    %v164 = vpop.f32.mrf.mxu0
    %v165 = vadd.f32 0.0, %v164
    %166 = vdwg.mxu0
    %v168 = vrot.slane %v165, 7
    %v170 = vadd.f32 %v112, %v168
    %v171 = vtanh.pop %v170
    %v173 = vrot.slane %v171, 1
    %v174 = vsel %vm90, %v173, 0
    %176 = vmatpush.msra.mxu0 0.0
    %177 = vmatpush.msra.mxu0 0.0
    %178 = vmatpush.msra.mxu0 0.0
    %179 = vmatpush.msra.mxu0 0.0
    %180 = vmatpush.msra.mxu0 0.0
    %181 = vmatpush.msra.mxu0 0.0
    %182 = vmatpush.msra.mxu0 0.0
    %183 = vmatpush.msra.mxu0 0.0
    %184 = vmatpush.msra.mxu0 0.0
    %185 = vmatpush.msra.mxu0 0.0
    %186 = vmatpush.msra.mxu0 0.0
    %187 = vmatpush.msra.mxu0 0.0
    %188 = vmatpush.msra.mxu0 %v117
    %189 = vmatpush.msra.mxu0 %v116
    %190 = vmatpush.msra.mxu0 %v115
    %191 = vmatpush.msra.mxu0 %v114
    %192 = vmatmul.f32.gmra.mxu0 %v174
    %v193 = vpop.f32.mrf.mxu0
    %v194 = vadd.f32 0.0, %v193
    %195 = vdwg.mxu0
    %v197 = vrot.slane %v194, 6
    %v199 = vadd.f32 %v112, %v197
    %v200 = vtanh.pop %v199
    %v202 = vrot.slane %v200, 2
    %v203 = vsel %vm90, %v202, 0
    %205 = vmatpush.msra.mxu0 0.0
    %206 = vmatpush.msra.mxu0 0.0
    %207 = vmatpush.msra.mxu0 0.0
    %208 = vmatpush.msra.mxu0 0.0
    %209 = vmatpush.msra.mxu0 0.0
    %210 = vmatpush.msra.mxu0 0.0
    %211 = vmatpush.msra.mxu0 0.0
    %212 = vmatpush.msra.mxu0 0.0
    %213 = vmatpush.msra.mxu0 0.0
    %214 = vmatpush.msra.mxu0 0.0
    %215 = vmatpush.msra.mxu0 0.0
    %216 = vmatpush.msra.mxu0 0.0
    %217 = vmatpush.msra.mxu0 %v117
    %218 = vmatpush.msra.mxu0 %v116
    %219 = vmatpush.msra.mxu0 %v115
    %220 = vmatpush.msra.mxu0 %v114
    %221 = vmatmul.f32.gmra.mxu0 %v203
    %v222 = vpop.f32.mrf.mxu0
    %v223 = vadd.f32 0.0, %v222
    %224 = vdwg.mxu0
    %v226 = vrot.slane %v223, 5
    %v228 = vadd.f32 %v112, %v226
    %v229 = vtanh.pop %v228
    %v231 = vrot.slane %v229, 3
    %v232 = vsel %vm90, %v231, 0
    %234 = vmatpush.msra.mxu0 0.0
    %235 = vmatpush.msra.mxu0 0.0
    %236 = vmatpush.msra.mxu0 0.0
    %237 = vmatpush.msra.mxu0 0.0
    %238 = vmatpush.msra.mxu0 0.0
    %239 = vmatpush.msra.mxu0 0.0
    %240 = vmatpush.msra.mxu0 0.0
    %241 = vmatpush.msra.mxu0 0.0
    %242 = vmatpush.msra.mxu0 0.0
    %243 = vmatpush.msra.mxu0 0.0
    %244 = vmatpush.msra.mxu0 0.0
    %245 = vmatpush.msra.mxu0 0.0
    %246 = vmatpush.msra.mxu0 %v117
    %247 = vmatpush.msra.mxu0 %v116
    %248 = vmatpush.msra.mxu0 %v115
    %249 = vmatpush.msra.mxu0 %v114
    %250 = vmatmul.f32.gmra.mxu0 %v232
    %v251 = vpop.f32.mrf.mxu0
    %v252 = vadd.f32 0.0, %v251
    %253 = vdwg.mxu0
    %v255 = vrot.slane %v252, 4
    %v257 = vadd.f32 %v112, %v255
    %v258 = vtanh.pop %v257
    %v260 = vrot.slane %v258, 4
    %v261 = vsel %vm90, %v260, 0
    %263 = vmatpush.msra.mxu0 0.0
    %264 = vmatpush.msra.mxu0 0.0
    %265 = vmatpush.msra.mxu0 0.0
    %266 = vmatpush.msra.mxu0 0.0
    %267 = vmatpush.msra.mxu0 0.0
    %268 = vmatpush.msra.mxu0 0.0
    %269 = vmatpush.msra.mxu0 0.0
    %270 = vmatpush.msra.mxu0 0.0
    %271 = vmatpush.msra.mxu0 0.0
    %272 = vmatpush.msra.mxu0 0.0
    %273 = vmatpush.msra.mxu0 0.0
    %274 = vmatpush.msra.mxu0 0.0
    %275 = vmatpush.msra.mxu0 %v117
    %276 = vmatpush.msra.mxu0 %v116
    %277 = vmatpush.msra.mxu0 %v115
    %278 = vmatpush.msra.mxu0 %v114
    %279 = vmatmul.f32.gmra.mxu0 %v261
    %v280 = vpop.f32.mrf.mxu0
    %v281 = vadd.f32 0.0, %v280
    %282 = vdwg.mxu0
    %v284 = vrot.slane %v281, 3
    %v286 = vadd.f32 %v112, %v284
    %v287 = vtanh.pop %v286
    %v289 = vrot.slane %v287, 5
    %v290 = vsel %vm90, %v289, 0
    %292 = vmatpush.msra.mxu0 0.0
    %293 = vmatpush.msra.mxu0 0.0
    %294 = vmatpush.msra.mxu0 0.0
    %295 = vmatpush.msra.mxu0 0.0
    %296 = vmatpush.msra.mxu0 0.0
    %297 = vmatpush.msra.mxu0 0.0
    %298 = vmatpush.msra.mxu0 0.0
    %299 = vmatpush.msra.mxu0 0.0
    %300 = vmatpush.msra.mxu0 0.0
    %301 = vmatpush.msra.mxu0 0.0
    %302 = vmatpush.msra.mxu0 0.0
    %303 = vmatpush.msra.mxu0 0.0
    %304 = vmatpush.msra.mxu0 %v117
    %305 = vmatpush.msra.mxu0 %v116
    %306 = vmatpush.msra.mxu0 %v115
    %307 = vmatpush.msra.mxu0 %v114
    %308 = vmatmul.f32.gmra.mxu0 %v290
    %v309 = vpop.f32.mrf.mxu0
    %v310 = vadd.f32 0.0, %v309
    %311 = vdwg.mxu0
    %v313 = vrot.slane %v310, 2
    %v315 = vadd.f32 %v112, %v313
    %v316 = vtanh.pop %v315
    %v318 = vrot.slane %v316, 6
    %v319 = vsel %vm90, %v318, 0
    %321 = vmatpush.msra.mxu0 0.0
    %322 = vmatpush.msra.mxu0 0.0
    %323 = vmatpush.msra.mxu0 0.0
    %324 = vmatpush.msra.mxu0 0.0
    %325 = vmatpush.msra.mxu0 0.0
    %326 = vmatpush.msra.mxu0 0.0
    %327 = vmatpush.msra.mxu0 0.0
    %328 = vmatpush.msra.mxu0 0.0
    %329 = vmatpush.msra.mxu0 0.0
    %330 = vmatpush.msra.mxu0 0.0
    %331 = vmatpush.msra.mxu0 0.0
    %332 = vmatpush.msra.mxu0 0.0
    %333 = vmatpush.msra.mxu0 %v117
    %334 = vmatpush.msra.mxu0 %v116
    %335 = vmatpush.msra.mxu0 %v115
    %336 = vmatpush.msra.mxu0 %v114
    %337 = vmatmul.f32.gmra.mxu0 %v319
    %v338 = vpop.f32.mrf.mxu0
    %v339 = vadd.f32 0.0, %v338
    %340 = vdwg.mxu0
    %v342 = vrot.slane %v339, 1
    %v344 = vadd.f32 %v112, %v342
    %v345 = vtanh.pop %v344
    %vm346 = vcmask 1040384
    %v347 = vsel %vm346, %v143, %v171
    %vm348 = vcmask 1041408
    %v349 = vsel %vm348, %v347, %v200
    %vm350 = vcmask 1042432
    %v351 = vsel %vm350, %v349, %v229
    %vm352 = vcmask 1043456
    %v353 = vsel %vm352, %v351, %v258
    %vm354 = vcmask 1044480
    %v355 = vsel %vm354, %v353, %v287
    %vm356 = vcmask 1045504
    %v357 = vsel %vm356, %v355, %v316
    %vm358 = vcmask 1046528
    %v359 = vsel %vm358, %v357, %v345
    %s360 = scalar_lea.vmem [#allocation7], 32
    %v361 = vld [vmem:[%s360] sm:$0xff]
    %v362 = vld [vmem:[%s360 + $0x8] sm:$0xff]
    %v363 = vld [vmem:[%s360 + $0x10] sm:$0xff]
    %v364 = vld [vmem:[%s360 + $0x18] sm:$0xff]
    %v365 = vld [vmem:[%s4 + $0x1] sm:$0x1]
    %v366 = vperm.slane %v365, 0
    %v368 = vsel %vm90, %v359, 0
    %370 = vmatpush.msra.mxu0 0.0
    %371 = vmatpush.msra.mxu0 0.0
    %372 = vmatpush.msra.mxu0 0.0
    %373 = vmatpush.msra.mxu0 0.0
    %374 = vmatpush.msra.mxu0 0.0
    %375 = vmatpush.msra.mxu0 0.0
    %376 = vmatpush.msra.mxu0 0.0
    %377 = vmatpush.msra.mxu0 0.0
    %378 = vmatpush.msra.mxu0 0.0
    %379 = vmatpush.msra.mxu0 0.0
    %380 = vmatpush.msra.mxu0 0.0
    %381 = vmatpush.msra.mxu0 0.0
    %382 = vmatpush.msra.mxu0 %v364
    %383 = vmatpush.msra.mxu0 %v363
    %384 = vmatpush.msra.mxu0 %v362
    %385 = vmatpush.msra.mxu0 %v361
    %386 = vmatmul.f32.gmra.mxu0 %v368
    %v387 = vpop.f32.mrf.mxu0
    %v388 = vadd.f32 %v366, %v387
    %389 = vdwg.mxu0
    %s390 = scalar_lea.vmem [#allocation8], 32
    %v391 = vld [vmem:[%s390] sm:$0xff]
    %v392 = vld [vmem:[%s390 + $0x8] sm:$0xff]
    %v393 = vld [vmem:[%s390 + $0x10] sm:$0xff]
    %v394 = vld [vmem:[%s390 + $0x18] sm:$0xff]
    %v395 = vld [vmem:[#allocation5 + $0x1] sm:$0x1]
    %v397 = vsel %vm90, %v395, 0
    %399 = vmatpush.msra.mxu0 0.0
    %400 = vmatpush.msra.mxu0 0.0
    %401 = vmatpush.msra.mxu0 0.0
    %402 = vmatpush.msra.mxu0 0.0
    %403 = vmatpush.msra.mxu0 0.0
    %404 = vmatpush.msra.mxu0 0.0
    %405 = vmatpush.msra.mxu0 0.0
    %406 = vmatpush.msra.mxu0 0.0
    %407 = vmatpush.msra.mxu0 0.0
    %408 = vmatpush.msra.mxu0 0.0
    %409 = vmatpush.msra.mxu0 0.0
    %410 = vmatpush.msra.mxu0 0.0
    %411 = vmatpush.msra.mxu0 %v394
    %412 = vmatpush.msra.mxu0 %v393
    %413 = vmatpush.msra.mxu0 %v392
    %414 = vmatpush.msra.mxu0 %v391
    %415 = vmatmul.f32.gmra.mxu0 %v397
    %v416 = vpop.f32.mrf.mxu0
    %v417 = vadd.f32 0.0, %v416
    %418 = vdwg.mxu0
    %v419 = vadd.f32 %v388, %v417
    %v420 = vtanh.pop %v419
    %v422 = vsel %vm90, %v420, 0
    %424 = vmatpush.msra.mxu0 0.0
    %425 = vmatpush.msra.mxu0 0.0
    %426 = vmatpush.msra.mxu0 0.0
    %427 = vmatpush.msra.mxu0 0.0
    %428 = vmatpush.msra.mxu0 0.0
    %429 = vmatpush.msra.mxu0 0.0
    %430 = vmatpush.msra.mxu0 0.0
    %431 = vmatpush.msra.mxu0 0.0
    %432 = vmatpush.msra.mxu0 0.0
    %433 = vmatpush.msra.mxu0 0.0
    %434 = vmatpush.msra.mxu0 0.0
    %435 = vmatpush.msra.mxu0 0.0
    %436 = vmatpush.msra.mxu0 %v394
    %437 = vmatpush.msra.mxu0 %v393
    %438 = vmatpush.msra.mxu0 %v392
    %439 = vmatpush.msra.mxu0 %v391
    %440 = vmatmul.f32.gmra.mxu0 %v422
    %v441 = vpop.f32.mrf.mxu0
    %v442 = vadd.f32 0.0, %v441
    %443 = vdwg.mxu0
    %v445 = vrot.slane %v442, 7
    %v447 = vadd.f32 %v388, %v445
    %v448 = vtanh.pop %v447
    %v450 = vrot.slane %v448, 1
    %v451 = vsel %vm90, %v450, 0
    %453 = vmatpush.msra.mxu0 0.0
    %454 = vmatpush.msra.mxu0 0.0
    %455 = vmatpush.msra.mxu0 0.0
    %456 = vmatpush.msra.mxu0 0.0
    %457 = vmatpush.msra.mxu0 0.0
    %458 = vmatpush.msra.mxu0 0.0
    %459 = vmatpush.msra.mxu0 0.0
    %460 = vmatpush.msra.mxu0 0.0
    %461 = vmatpush.msra.mxu0 0.0
    %462 = vmatpush.msra.mxu0 0.0
    %463 = vmatpush.msra.mxu0 0.0
    %464 = vmatpush.msra.mxu0 0.0
    %465 = vmatpush.msra.mxu0 %v394
    %466 = vmatpush.msra.mxu0 %v393
    %467 = vmatpush.msra.mxu0 %v392
    %468 = vmatpush.msra.mxu0 %v391
    %469 = vmatmul.f32.gmra.mxu0 %v451
    %v470 = vpop.f32.mrf.mxu0
    %v471 = vadd.f32 0.0, %v470
    %472 = vdwg.mxu0
    %v474 = vrot.slane %v471, 6
    %v476 = vadd.f32 %v388, %v474
    %v477 = vtanh.pop %v476
    %v479 = vrot.slane %v477, 2
    %v480 = vsel %vm90, %v479, 0
    %482 = vmatpush.msra.mxu0 0.0
    %483 = vmatpush.msra.mxu0 0.0
    %484 = vmatpush.msra.mxu0 0.0
    %485 = vmatpush.msra.mxu0 0.0
    %486 = vmatpush.msra.mxu0 0.0
    %487 = vmatpush.msra.mxu0 0.0
    %488 = vmatpush.msra.mxu0 0.0
    %489 = vmatpush.msra.mxu0 0.0
    %490 = vmatpush.msra.mxu0 0.0
    %491 = vmatpush.msra.mxu0 0.0
    %492 = vmatpush.msra.mxu0 0.0
    %493 = vmatpush.msra.mxu0 0.0
    %494 = vmatpush.msra.mxu0 %v394
    %495 = vmatpush.msra.mxu0 %v393
    %496 = vmatpush.msra.mxu0 %v392
    %497 = vmatpush.msra.mxu0 %v391
    %498 = vmatmul.f32.gmra.mxu0 %v480
    %v499 = vpop.f32.mrf.mxu0
    %v500 = vadd.f32 0.0, %v499
    %501 = vdwg.mxu0
    %v503 = vrot.slane %v500, 5
    %v505 = vadd.f32 %v388, %v503
    %v506 = vtanh.pop %v505
    %v508 = vrot.slane %v506, 3
    %v509 = vsel %vm90, %v508, 0
    %511 = vmatpush.msra.mxu0 0.0
    %512 = vmatpush.msra.mxu0 0.0
    %513 = vmatpush.msra.mxu0 0.0
    %514 = vmatpush.msra.mxu0 0.0
    %515 = vmatpush.msra.mxu0 0.0
    %516 = vmatpush.msra.mxu0 0.0
    %517 = vmatpush.msra.mxu0 0.0
    %518 = vmatpush.msra.mxu0 0.0
    %519 = vmatpush.msra.mxu0 0.0
    %520 = vmatpush.msra.mxu0 0.0
    %521 = vmatpush.msra.mxu0 0.0
    %522 = vmatpush.msra.mxu0 0.0
    %523 = vmatpush.msra.mxu0 %v394
    %524 = vmatpush.msra.mxu0 %v393
    %525 = vmatpush.msra.mxu0 %v392
    %526 = vmatpush.msra.mxu0 %v391
    %527 = vmatmul.f32.gmra.mxu0 %v509
    %v528 = vpop.f32.mrf.mxu0
    %v529 = vadd.f32 0.0, %v528
    %530 = vdwg.mxu0
    %v532 = vrot.slane %v529, 4
    %v534 = vadd.f32 %v388, %v532
    %v535 = vtanh.pop %v534
    %v537 = vrot.slane %v535, 4
    %v538 = vsel %vm90, %v537, 0
    %540 = vmatpush.msra.mxu0 0.0
    %541 = vmatpush.msra.mxu0 0.0
    %542 = vmatpush.msra.mxu0 0.0
    %543 = vmatpush.msra.mxu0 0.0
    %544 = vmatpush.msra.mxu0 0.0
    %545 = vmatpush.msra.mxu0 0.0
    %546 = vmatpush.msra.mxu0 0.0
    %547 = vmatpush.msra.mxu0 0.0
    %548 = vmatpush.msra.mxu0 0.0
    %549 = vmatpush.msra.mxu0 0.0
    %550 = vmatpush.msra.mxu0 0.0
    %551 = vmatpush.msra.mxu0 0.0
    %552 = vmatpush.msra.mxu0 %v394
    %553 = vmatpush.msra.mxu0 %v393
    %554 = vmatpush.msra.mxu0 %v392
    %555 = vmatpush.msra.mxu0 %v391
    %556 = vmatmul.f32.gmra.mxu0 %v538
    %v557 = vpop.f32.mrf.mxu0
    %v558 = vadd.f32 0.0, %v557
    %559 = vdwg.mxu0
    %v561 = vrot.slane %v558, 3
    %v563 = vadd.f32 %v388, %v561
    %v564 = vtanh.pop %v563
    %v566 = vrot.slane %v564, 5
    %v567 = vsel %vm90, %v566, 0
    %569 = vmatpush.msra.mxu0 0.0
    %570 = vmatpush.msra.mxu0 0.0
    %571 = vmatpush.msra.mxu0 0.0
    %572 = vmatpush.msra.mxu0 0.0
    %573 = vmatpush.msra.mxu0 0.0
    %574 = vmatpush.msra.mxu0 0.0
    %575 = vmatpush.msra.mxu0 0.0
    %576 = vmatpush.msra.mxu0 0.0
    %577 = vmatpush.msra.mxu0 0.0
    %578 = vmatpush.msra.mxu0 0.0
    %579 = vmatpush.msra.mxu0 0.0
    %580 = vmatpush.msra.mxu0 0.0
    %581 = vmatpush.msra.mxu0 %v394
    %582 = vmatpush.msra.mxu0 %v393
    %583 = vmatpush.msra.mxu0 %v392
    %584 = vmatpush.msra.mxu0 %v391
    %585 = vmatmul.f32.gmra.mxu0 %v567
    %v586 = vpop.f32.mrf.mxu0
    %v587 = vadd.f32 0.0, %v586
    %588 = vdwg.mxu0
    %v590 = vrot.slane %v587, 2
    %v592 = vadd.f32 %v388, %v590
    %v593 = vtanh.pop %v592
    %v595 = vrot.slane %v593, 6
    %v596 = vsel %vm90, %v595, 0
    %598 = vmatpush.msra.mxu0 0.0
    %599 = vmatpush.msra.mxu0 0.0
    %600 = vmatpush.msra.mxu0 0.0
    %601 = vmatpush.msra.mxu0 0.0
    %602 = vmatpush.msra.mxu0 0.0
    %603 = vmatpush.msra.mxu0 0.0
    %604 = vmatpush.msra.mxu0 0.0
    %605 = vmatpush.msra.mxu0 0.0
    %606 = vmatpush.msra.mxu0 0.0
    %607 = vmatpush.msra.mxu0 0.0
    %608 = vmatpush.msra.mxu0 0.0
    %609 = vmatpush.msra.mxu0 0.0
    %610 = vmatpush.msra.mxu0 %v394
    %611 = vmatpush.msra.mxu0 %v393
    %612 = vmatpush.msra.mxu0 %v392
    %613 = vmatpush.msra.mxu0 %v391
    %614 = vmatmul.f32.gmra.mxu0 %v596
    %v615 = vpop.f32.mrf.mxu0
    %v616 = vadd.f32 0.0, %v615
    %617 = vdwg.mxu0
    %v619 = vrot.slane %v616, 1
    %v621 = vadd.f32 %v388, %v619
    %v622 = vtanh.pop %v621
    %v623 = vsel %vm346, %v420, %v448
    %v624 = vsel %vm348, %v623, %v477
    %v625 = vsel %vm350, %v624, %v506
    %v626 = vsel %vm352, %v625, %v535
    %v627 = vsel %vm354, %v626, %v564
    %v628 = vsel %vm356, %v627, %v593
    %v629 = vsel %vm358, %v628, %v622
    %v631 = vrot.slane %v345, 7
    %v634 = vrot.slane %v622, 6
    %v636 = vsel %vm346, %v631, %v634
    %637 = vst.msk [vmem:[#allocation10] sm:$0xff] %vm90, %v629
    %vm638 = vcmask 254976
    %639 = vst.msk [vmem:[#allocation11] sm:$0x3] %vm638, %v636
    // Predicated region
    $region38: #{tpu_custom_call.1} parent=1 // pred_check
      _
    $region39: #{tpu_custom_call.1} parent=1 // pred_check_branch
      %641 = sbr.rel (0) target = $region41
    $region40: #{tpu_custom_call.1} parent=1 // pred_region
      %643 = vsyncadd [#allocation4], 0
      %s645 = sshll.u32 [#allocation10], 4
      %s646 = int_to_ptr.vmem [resolvable:$true] %s645
      %s647 = sshll.u32 %s5, 4
      %s648 = int_to_ptr.hbm [resolvable:$true] %s647
      %650 = dma.vmem_to_hbm [thread:$0]  %s646, 128, %s648, [#allocation4]
    $region41: #{tpu_custom_call.1} parent=1 // pred_fallthru
      _
    // Predicated region
    $region42: #{tpu_custom_call.1} parent=1 // pred_check
      _
    $region43: #{tpu_custom_call.1} parent=1 // pred_check_branch
      %652 = sbr.rel (0) target = $region45
    $region44: #{tpu_custom_call.1} parent=1 // pred_region
      %654 = vsyncadd [#allocation12], 0
      %s656 = sshll.u32 [#allocation11], 4
      %s657 = int_to_ptr.vmem [resolvable:$true] %s656
      %s658 = sshll.u32 %s6, 4
      %s659 = int_to_ptr.hbm [resolvable:$true] %s658
      %661 = dma.vmem_to_hbm [thread:$0]  %s657, 32, %s659, [#allocation12]
    $region45: #{tpu_custom_call.1} parent=1 // pred_fallthru
      _
    // Predicated region
    $region46: #{tpu_custom_call.1} parent=1 // pred_check
      _
    $region47: #{tpu_custom_call.1} parent=1 // pred_check_branch
      %663 = sbr.rel (0) target = $region49
    $region48: #{tpu_custom_call.1} parent=1 // pred_region
      %665 = dma.done [#allocation4], 128
    $region49: #{tpu_custom_call.1} parent=1 // pred_fallthru
      _
    // Predicated region
    $region50: #{tpu_custom_call.1} parent=1 // pred_check
      _
    $region51: #{tpu_custom_call.1} parent=1 // pred_check_branch
      %667 = sbr.rel (0) target = $region53
    $region52: #{tpu_custom_call.1} parent=1 // pred_region
      %669 = dma.done [#allocation12], 32
    $region53: #{tpu_custom_call.1} parent=1 // pred_fallthru
      _
    %670 = vsyncpa [#allocation3], 1
    %671 = vsyncpa [#allocation6], 1
    %672 = vsyncpa [#allocation9], 1
    %673 = vsyncpa [#allocation4], 1
    %674 = vsyncpa [#allocation12], 1

</llo_original>
